<compile_context>
chip_gen: v7x
topology: tpu7x:2x2x1
jax: 0.10.0
libtpu: 0.0.40
codegen_flags: <defaults>
</compile_context>

<pallas_src>
import jax
import jax.numpy as jnp
from jax.experimental import pallas as pl
from jax.experimental.pallas import tpu as pltpu


def _round_up(x, m):
    return ((x + m - 1) // m) * m


def _classifier_deep_kernel(x_ref, w1_ref, b1_ref, w2_ref, out_ref):
    # fc1: (tb, inc) @ (inc, 512) -> f32 accumulation, bias added in f32.
    h = jnp.dot(x_ref[...], w1_ref[...], preferred_element_type=jnp.float32)
    h = h + b1_ref[...]  # b1 kept in f32; single broadcast per grid step
    # GradientReverseLayer: identity in the forward pass (x * 1.0).
    # fc2 (no bias): cast activations to the weight dtype so the second matmul
    # also runs on the bf16 MXU path; accumulate in f32.
    o = jnp.dot(h.astype(w2_ref.dtype), w2_ref[...],
                preferred_element_type=jnp.float32)
    out_ref[...] = o.astype(out_ref.dtype)


def classifier_deep_forward(x, w1, b1, w2, *, reverse=False, eta=0.1,
                            tb=256, compute_dtype=jnp.bfloat16):
    """Forward pass of classifier_deep.

    x:  (B, inc)          activations
    w1: (inc, 512)        fc1 weight, stored (in, out)
    b1: (1, 512)          fc1 bias
    w2: (512, num_classes) fc2 weight, stored (in, out), no bias
    """
    del reverse, eta  # grad-reverse is identity in forward; temp is unused
    B, inc = x.shape
    hidden = w1.shape[1]
    num_classes = w2.shape[1]
    out_dtype = x.dtype

    # ---- wrapper-side padding / casting (pure layout plumbing) ------------
    # Lane-dense class dim (multiple of 128): unmasked stores + fuller MXU.
    nc_pad = _round_up(max(num_classes, 128), 128)
    # Batch tile: multiple of 16 (bf16 sublane packing) and no larger than the
    # padded batch; padded batch is a multiple of the tile so the grid divides.
    granule = 16 if compute_dtype == jnp.bfloat16 else 8
    B_pad = _round_up(B, granule)
    tb_eff = min(_round_up(tb, granule), B_pad)
    B_pad = _round_up(B_pad, tb_eff)

    x_c = x.astype(compute_dtype)
    if B_pad != B:
        x_c = jnp.pad(x_c, ((0, B_pad - B), (0, 0)))
    w1_c = w1.astype(compute_dtype)
    b1_c = b1.astype(jnp.float32).reshape(1, hidden)
    w2_c = w2.astype(compute_dtype)
    if nc_pad != num_classes:
        w2_c = jnp.pad(w2_c, ((0, 0), (0, nc_pad - num_classes)))

    grid = (B_pad // tb_eff,)

    out_padded = pl.pallas_call(
        _classifier_deep_kernel,
        out_shape=jax.ShapeDtypeStruct((B_pad, nc_pad), jnp.float32),
        grid=grid,
        in_specs=[
            pl.BlockSpec((tb_eff, inc), lambda i: (i, 0)),         # x tile
            pl.BlockSpec((inc, hidden), lambda i: (0, 0)),         # W1 (resident)
            pl.BlockSpec((1, hidden), lambda i: (0, 0)),           # b1 (f32)
            pl.BlockSpec((hidden, nc_pad), lambda i: (0, 0)),      # W2 (resident)
        ],
        out_specs=pl.BlockSpec((tb_eff, nc_pad), lambda i: (i, 0)),
        compiler_params=pltpu.CompilerParams(
            dimension_semantics=("parallel",),
            vmem_limit_bytes=64 << 20,
        ),
    )(x_c, w1_c, b1_c, w2_c)

    # Slice off batch/class padding outside the kernel.
    return out_padded[:B, :num_classes].astype(out_dtype)


def reference_forward(x, w1, b1, w2, compute_dtype=jnp.bfloat16):
    """Pure-JAX reference using the same precision recipe as the kernel."""
    xc = x.astype(compute_dtype)
    w1c = w1.astype(compute_dtype)
    w2c = w2.astype(compute_dtype)
    h = jnp.dot(xc, w1c, preferred_element_type=jnp.float32)
    h = h + b1.astype(jnp.float32)
    o = jnp.dot(h.astype(compute_dtype), w2c, preferred_element_type=jnp.float32)
    return o.astype(x.dtype)


if __name__ == "__main__":
    # Small shapes consistent with the module: fc1 output is fixed at 512.
    batch = 8
    inc = 256          # small stand-in for the default inc=4096
    hidden = 512       # hardcoded by the module (fc1 = Linear(inc, 512))
    num_classes = 16

    key = jax.random.PRNGKey(0)
    kx, k1, kb, k2 = jax.random.split(key, 4)

    x = jax.random.normal(kx, (batch, inc), dtype=jnp.float32)
    # Deterministic synthetic parameters (shapes from nn.Linear in __init__).
    # Stored as (in, out) = transpose of PyTorch's (out, in) weight layout.
    w1 = jax.random.normal(k1, (inc, hidden), dtype=jnp.float32) * (1.0 / inc ** 0.5)
    b1 = jax.random.normal(kb, (1, hidden), dtype=jnp.float32) * 0.01
    w2 = jax.random.normal(k2, (hidden, num_classes), dtype=jnp.float32) * (1.0 / hidden ** 0.5)

    out = classifier_deep_forward(x, w1, b1, w2)
    out = jax.block_until_ready(out)

    ref = reference_forward(x, w1, b1, w2)
    assert out.shape == (batch, num_classes)
    assert jnp.allclose(out, ref, atol=1e-2, rtol=1e-2), "mismatch vs reference"

    print("KERNEL_OK")
</pallas_src>

<mosaic_0001>
module attributes {stable_mosaic.version = 11 : i64} {
  func.func @_classifier_deep_kernel(%arg0: i32, %arg1: memref<16x256xbf16, #tpu.memory_space<vmem>>, %arg2: memref<256x512xbf16, #tpu.memory_space<vmem>>, %arg3: memref<1x512xf32, #tpu.memory_space<vmem>>, %arg4: memref<512x128xbf16, #tpu.memory_space<vmem>>, %arg5: memref<16x128xf32, #tpu.memory_space<vmem>>) attributes {dimension_semantics = [#tpu.dimension_semantics<parallel>], iteration_bounds = array<i64: 1>, scalar_prefetch = 0 : i64, scratch_operands = 0 : i64, tpu.core_type = #tpu.core_type<tc>, window_params = [{transform_indices = @transform_0, window_bounds = array<i64: 16, 256>}, {pipeline_mode = #tpu.pipeline_mode<synchronous>, transform_indices = @transform_1, window_bounds = array<i64: 256, 512>}, {pipeline_mode = #tpu.pipeline_mode<synchronous>, transform_indices = @transform_2, window_bounds = array<i64: 1, 512>}, {pipeline_mode = #tpu.pipeline_mode<synchronous>, transform_indices = @transform_3, window_bounds = array<i64: 512, 128>}, {transform_indices = @transform_4, window_bounds = array<i64: 16, 128>}]} {
    %c0 = arith.constant 0 : index
    %c0_0 = arith.constant 0 : index
    %0 = vector.load %arg1[%c0, %c0_0] : memref<16x256xbf16, #tpu.memory_space<vmem>>, vector<16x256xbf16>
    %c0_1 = arith.constant 0 : index
    %c0_2 = arith.constant 0 : index
    %1 = vector.load %arg2[%c0_1, %c0_2] : memref<256x512xbf16, #tpu.memory_space<vmem>>, vector<256x512xbf16>
    %cst = arith.constant dense<0.000000e+00> : vector<16x512xf32>
    %2 = tpu.matmul %0, %1, %cst {dimension_numbers = #tpu.dot_dimension_numbers<[1], [0], [0], [1], [0, 0, 1, 1], [], []>} : vector<16x256xbf16>, vector<256x512xbf16>, vector<16x512xf32> -> vector<16x512xf32>
    %c0_3 = arith.constant 0 : index
    %c0_4 = arith.constant 0 : index
    %3 = vector.load %arg3[%c0_3, %c0_4] : memref<1x512xf32, #tpu.memory_space<vmem>>, vector<1x512xf32>
    %4 = vector.broadcast %3 : vector<1x512xf32> to vector<16x512xf32>
    %5 = arith.addf %2, %4 : vector<16x512xf32>
    %6 = arith.truncf %5 : vector<16x512xf32> to vector<16x512xbf16>
    %c0_5 = arith.constant 0 : index
    %c0_6 = arith.constant 0 : index
    %7 = vector.load %arg4[%c0_5, %c0_6] : memref<512x128xbf16, #tpu.memory_space<vmem>>, vector<512x128xbf16>
    %cst_7 = arith.constant dense<0.000000e+00> : vector<16x128xf32>
    %8 = tpu.matmul %6, %7, %cst_7 {dimension_numbers = #tpu.dot_dimension_numbers<[1], [0], [0], [1], [0, 0, 1, 1], [], []>} : vector<16x512xbf16>, vector<512x128xbf16>, vector<16x128xf32> -> vector<16x128xf32>
    %c0_8 = arith.constant 0 : index
    %c0_9 = arith.constant 0 : index
    %9 = vector.load %arg5[%c0_8, %c0_9] : memref<16x128xf32, #tpu.memory_space<vmem>>, vector<16x128xf32>
    tpu.vector_store %arg5[%c0_8, %c0_9], %8 {strides = array<i32>} : memref<16x128xf32, #tpu.memory_space<vmem>>, vector<16x128xf32>,
    return
  }
  func.func @transform_0(%arg0: i32) -> (i32, i32) {
    %c0_i32 = arith.constant 0 : i32
    %c0_i32_0 = arith.constant 0 : i32
    return %arg0, %c0_i32 : i32, i32
  }
  func.func @transform_1(%arg0: i32) -> (i32, i32) {
    %c0_i32 = arith.constant 0 : i32
    %c0_i32_0 = arith.constant 0 : i32
    %c0_i32_1 = arith.constant 0 : i32
    return %c0_i32, %c0_i32_0 : i32, i32
  }
  func.func @transform_2(%arg0: i32) -> (i32, i32) {
    %c0_i32 = arith.constant 0 : i32
    %c0_i32_0 = arith.constant 0 : i32
    %c0_i32_1 = arith.constant 0 : i32
    return %c0_i32, %c0_i32_0 : i32, i32
  }
  func.func @transform_3(%arg0: i32) -> (i32, i32) {
    %c0_i32 = arith.constant 0 : i32
    %c0_i32_0 = arith.constant 0 : i32
    %c0_i32_1 = arith.constant 0 : i32
    return %c0_i32, %c0_i32_0 : i32, i32
  }
  func.func @transform_4(%arg0: i32) -> (i32, i32) {
    %c0_i32 = arith.constant 0 : i32
    %c0_i32_0 = arith.constant 0 : i32
    return %arg0, %c0_i32 : i32, i32
  }
}

</mosaic_0001>

<llo_original>
// kernel: tpu_custom_call.1
$region0: #{tpu_custom_call.1}
  #allocation0 [shape = 'u32[]', space=smem, size = 0x4, offset = 0x4, fixed_abs, tag = 'smem constant byte address 0x4 - core index']
  #allocation1 [shape = 'u32[144,128]{1,0:T(1,128)}', space=vmem, size = 0x12000, scoped, tag = 'internal scratch']
  %s0 = inlined_call_operand.hbm [shape: bf16[16,256], index: 0, kind: input, shape index: {}]
  %s1 = inlined_call_operand.hbm [shape: bf16[256,512], index: 1, kind: input, shape index: {}]
  %s2 = inlined_call_operand.hbm [shape: f32[1,512], index: 2, kind: input, shape index: {}]
  %s3 = inlined_call_operand.hbm [shape: bf16[512,128], index: 3, kind: input, shape index: {}]
  %s4 = inlined_call_operand.hbm [shape: f32[16,128], index: 4, kind: output, shape index: {}]
  %s5 = sld [smem:[#allocation0]]
  $region42: #{tpu_custom_call.1} parent=0
    _
  %s7 = ssub.s32 1, %s5
  %s8 = scalar_select 0, %s7, %s5
  $region1: #{tpu_custom_call.1} parent=0
    #allocation2 [shape = 'u8[8192]{0}', space=vmem, size = 0x2000, scoped, tag = 'input window, operand 0, single buffered']
    #allocation3 [shape = 's32[1]{0}', space=sflag, size = 0x4, scoped, tag = 'scoped memory for tpu_custom_call.1']
    #allocation4 [shape = 's32[1]{0}', space=sflag, size = 0x4, scoped, tag = 'scoped memory for tpu_custom_call.1']
    #allocation5 [shape = 'u8[262144]{0}', space=vmem, size = 0x40000, scoped, tag = 'input window, operand 1, single buffered']
    #allocation6 [shape = 's32[1]{0}', space=sflag, size = 0x4, scoped, tag = 'scoped memory for tpu_custom_call.1']
    #allocation7 [shape = 'u8[2048]{0}', space=vmem, size = 0x800, scoped, tag = 'input window, operand 2, single buffered']
    #allocation8 [shape = 'u8[131072]{0}', space=vmem, size = 0x20000, scoped, tag = 'input window, operand 3, single buffered']
    #allocation9 [shape = 's32[1]{0}', space=sflag, size = 0x4, scoped, tag = 'scoped memory for tpu_custom_call.1']
    #allocation10 [shape = 'u8[8192]{0}', space=vmem, size = 0x2000, scoped, tag = 'output window, operand 0, single buffered']
    %9 = vsyncpa [#allocation3], 0
    %10 = vsyncpa [#allocation6], 0
    %11 = vsyncpa [#allocation9], 0
    %12 = vsyncpa [#allocation4], 0
    // Predicated region
    $region2: #{tpu_custom_call.1} parent=1 // pred_check
      _
    $region3: #{tpu_custom_call.1} parent=1 // pred_check_branch
      %14 = sbr.rel (0) target = $region5
    $region4: #{tpu_custom_call.1} parent=1 // pred_region
      %s16 = ssub.s32 256, 256
      %17 = vsyncadd [#allocation3], %s16
      %s18 = sshll.u32 [#allocation2], 4
      %s19 = int_to_ptr.vmem [resolvable:$true] %s18
      %24 = dma.hbm_to_vmem [thread:$0]  %s0, 256, %s19, [#allocation3], 128, 128, 8
    $region5: #{tpu_custom_call.1} parent=1 // pred_fallthru
      _
    // Predicated region
    $region6: #{tpu_custom_call.1} parent=1 // pred_check
      _
    $region7: #{tpu_custom_call.1} parent=1 // pred_check_branch
      %26 = sbr.rel (0) target = $region9
    $region8: #{tpu_custom_call.1} parent=1 // pred_region
      %s28 = ssub.s32 8192, 8192
      %29 = vsyncadd [#allocation6], %s28
      %s30 = sshll.u32 [#allocation5], 4
      %s31 = int_to_ptr.vmem [resolvable:$true] %s30
      %36 = dma.hbm_to_vmem [thread:$0]  %s1, 8192, %s31, [#allocation6], 256, 256, 16
    $region9: #{tpu_custom_call.1} parent=1 // pred_fallthru
      _
    // Predicated region
    $region10: #{tpu_custom_call.1} parent=1 // pred_check
      _
    $region11: #{tpu_custom_call.1} parent=1 // pred_check_branch
      %38 = sbr.rel (0) target = $region13
    $region12: #{tpu_custom_call.1} parent=1 // pred_region
      %s40 = ssub.s32 64, 64
      %41 = vsyncadd [#allocation6], %s40
      %s43 = sshll.u32 [#allocation7], 4
      %s44 = int_to_ptr.vmem [resolvable:$true] %s43
      %46 = dma.hbm_to_vmem [thread:$0]  %s2, 64, %s44, [#allocation6]
    $region13: #{tpu_custom_call.1} parent=1 // pred_fallthru
      _
    // Predicated region
    $region14: #{tpu_custom_call.1} parent=1 // pred_check
      _
    $region15: #{tpu_custom_call.1} parent=1 // pred_check_branch
      %48 = sbr.rel (0) target = $region17
    $region16: #{tpu_custom_call.1} parent=1 // pred_region
      %s50 = ssub.s32 4096, 4096
      %51 = vsyncadd [#allocation9], %s50
      %s52 = sshll.u32 [#allocation8], 4
      %s53 = int_to_ptr.vmem [resolvable:$true] %s52
      %58 = dma.hbm_to_vmem [thread:$0]  %s3, 4096, %s53, [#allocation9], 64, 64, 4
    $region17: #{tpu_custom_call.1} parent=1 // pred_fallthru
      _
    // Predicated region
    $region18: #{tpu_custom_call.1} parent=1 // pred_check
      _
    $region19: #{tpu_custom_call.1} parent=1 // pred_check_branch
      %60 = sbr.rel (0) target = $region21
    $region20: #{tpu_custom_call.1} parent=1 // pred_region
      %61 = dma.done [#allocation3], 256
    $region21: #{tpu_custom_call.1} parent=1 // pred_fallthru
      _
    // Predicated region
    $region22: #{tpu_custom_call.1} parent=1 // pred_check
      _
    $region23: #{tpu_custom_call.1} parent=1 // pred_check_branch
      %63 = sbr.rel (0) target = $region25
    $region24: #{tpu_custom_call.1} parent=1 // pred_region
      %64 = dma.done [#allocation6], 8192
    $region25: #{tpu_custom_call.1} parent=1 // pred_fallthru
      _
    // Predicated region
    $region26: #{tpu_custom_call.1} parent=1 // pred_check
      _
    $region27: #{tpu_custom_call.1} parent=1 // pred_check_branch
      %66 = sbr.rel (0) target = $region29
    $region28: #{tpu_custom_call.1} parent=1 // pred_region
      %67 = dma.done [#allocation6], 64
    $region29: #{tpu_custom_call.1} parent=1 // pred_fallthru
      _
    // Predicated region
    $region30: #{tpu_custom_call.1} parent=1 // pred_check
      _
    $region31: #{tpu_custom_call.1} parent=1 // pred_check_branch
      %69 = sbr.rel (0) target = $region33
    $region32: #{tpu_custom_call.1} parent=1 // pred_region
      %70 = dma.done [#allocation9], 4096
    $region33: #{tpu_custom_call.1} parent=1 // pred_fallthru
      _
    %v72 = vld [vmem:[#allocation2] sm:$0xff]
    %v73 = vld [vmem:[#allocation2 + $0x8] sm:$0xff]
    %v74 = vld [vmem:[#allocation5] sm:$0xff]
    %v75 = vld [vmem:[#allocation5 + $0x8] sm:$0xff]
    %v76 = vld [vmem:[#allocation5 + $0x10] sm:$0xff]
    %v77 = vld [vmem:[#allocation5 + $0x18] sm:$0xff]
    %v78 = vld [vmem:[#allocation5 + $0x20] sm:$0xff]
    %v79 = vld [vmem:[#allocation5 + $0x28] sm:$0xff]
    %v80 = vld [vmem:[#allocation5 + $0x30] sm:$0xff]
    %v81 = vld [vmem:[#allocation5 + $0x38] sm:$0xff]
    %v82 = vld [vmem:[#allocation5 + $0x40] sm:$0xff]
    %v83 = vld [vmem:[#allocation5 + $0x48] sm:$0xff]
    %v84 = vld [vmem:[#allocation5 + $0x50] sm:$0xff]
    %v85 = vld [vmem:[#allocation5 + $0x58] sm:$0xff]
    %v86 = vld [vmem:[#allocation5 + $0x60] sm:$0xff]
    %v87 = vld [vmem:[#allocation5 + $0x68] sm:$0xff]
    %v88 = vld [vmem:[#allocation5 + $0x70] sm:$0xff]
    %v89 = vld [vmem:[#allocation5 + $0x78] sm:$0xff]
    %v90 = vld [vmem:[#allocation5 + $0x80] sm:$0xff]
    %v91 = vld [vmem:[#allocation5 + $0x88] sm:$0xff]
    %v92 = vld [vmem:[#allocation5 + $0x90] sm:$0xff]
    %v93 = vld [vmem:[#allocation5 + $0x98] sm:$0xff]
    %v94 = vld [vmem:[#allocation5 + $0xa0] sm:$0xff]
    %v95 = vld [vmem:[#allocation5 + $0xa8] sm:$0xff]
    %v96 = vld [vmem:[#allocation5 + $0xb0] sm:$0xff]
    %v97 = vld [vmem:[#allocation5 + $0xb8] sm:$0xff]
    %v98 = vld [vmem:[#allocation5 + $0xc0] sm:$0xff]
    %v99 = vld [vmem:[#allocation5 + $0xc8] sm:$0xff]
    %v100 = vld [vmem:[#allocation5 + $0xd0] sm:$0xff]
    %v101 = vld [vmem:[#allocation5 + $0xd8] sm:$0xff]
    %v102 = vld [vmem:[#allocation5 + $0xe0] sm:$0xff]
    %v103 = vld [vmem:[#allocation5 + $0xe8] sm:$0xff]
    %v104 = vld [vmem:[#allocation5 + $0xf0] sm:$0xff]
    %v105 = vld [vmem:[#allocation5 + $0xf8] sm:$0xff]
    %v106 = vld [vmem:[#allocation5 + $0x100] sm:$0xff]
    %v107 = vld [vmem:[#allocation5 + $0x108] sm:$0xff]
    %v108 = vld [vmem:[#allocation5 + $0x110] sm:$0xff]
    %v109 = vld [vmem:[#allocation5 + $0x118] sm:$0xff]
    %v110 = vld [vmem:[#allocation5 + $0x120] sm:$0xff]
    %v111 = vld [vmem:[#allocation5 + $0x128] sm:$0xff]
    %v112 = vld [vmem:[#allocation5 + $0x130] sm:$0xff]
    %v113 = vld [vmem:[#allocation5 + $0x138] sm:$0xff]
    %v114 = vld [vmem:[#allocation5 + $0x140] sm:$0xff]
    %v115 = vld [vmem:[#allocation5 + $0x148] sm:$0xff]
    %v116 = vld [vmem:[#allocation5 + $0x150] sm:$0xff]
    %v117 = vld [vmem:[#allocation5 + $0x158] sm:$0xff]
    %v118 = vld [vmem:[#allocation5 + $0x160] sm:$0xff]
    %v119 = vld [vmem:[#allocation5 + $0x168] sm:$0xff]
    %v120 = vld [vmem:[#allocation5 + $0x170] sm:$0xff]
    %v121 = vld [vmem:[#allocation5 + $0x178] sm:$0xff]
    %v122 = vld [vmem:[#allocation5 + $0x180] sm:$0xff]
    %v123 = vld [vmem:[#allocation5 + $0x188] sm:$0xff]
    %v124 = vld [vmem:[#allocation5 + $0x190] sm:$0xff]
    %v125 = vld [vmem:[#allocation5 + $0x198] sm:$0xff]
    %v126 = vld [vmem:[#allocation5 + $0x1a0] sm:$0xff]
    %v127 = vld [vmem:[#allocation5 + $0x1a8] sm:$0xff]
    %v128 = vld [vmem:[#allocation5 + $0x1b0] sm:$0xff]
    %v129 = vld [vmem:[#allocation5 + $0x1b8] sm:$0xff]
    %v130 = vld [vmem:[#allocation5 + $0x1c0] sm:$0xff]
    %v131 = vld [vmem:[#allocation5 + $0x1c8] sm:$0xff]
    %v132 = vld [vmem:[#allocation5 + $0x1d0] sm:$0xff]
    %v133 = vld [vmem:[#allocation5 + $0x1d8] sm:$0xff]
    %v134 = vld [vmem:[#allocation5 + $0x1e0] sm:$0xff]
    %v135 = vld [vmem:[#allocation5 + $0x1e8] sm:$0xff]
    %v136 = vld [vmem:[#allocation5 + $0x1f0] sm:$0xff]
    %v137 = vld [vmem:[#allocation5 + $0x1f8] sm:$0xff]
    %v138 = vld [vmem:[#allocation7] sm:$0xf]
    %v140 = vlaneseq
    %v141 = vshrl.u32 %v140, 7
    %v142 = vsub.s32 0, %v141
    %v143 = vrot.slane %v138, %v142
    %v144 = vlaneseq
    %v145 = vshrl.u32 %v144, 7
    %v146 = vsub.s32 1, %v145
    %v147 = vrot.slane %v138, %v146
    %v148 = vlaneseq
    %v149 = vshrl.u32 %v148, 7
    %v150 = vsub.s32 2, %v149
    %v151 = vrot.slane %v138, %v150
    %v152 = vlaneseq
    %v153 = vshrl.u32 %v152, 7
    %v154 = vsub.s32 3, %v153
    %v155 = vrot.slane %v138, %v154
    %v162 = vunpack.c.l.b16 %v72
    %v163 = vunpack.c.h.b16 %v72
    %v164 = vunpack.c.l.b16 %v73
    %v165 = vunpack.c.h.b16 %v73
    %v166 = vpack.c.b16 %v164, %v162
    %v167 = vpack.c.b16 %v165, %v163
    %v234 = vunpack.c.l.b16 %v74
    %v235 = vunpack.c.h.b16 %v74
    %v236 = vunpack.c.l.b16 %v75
    %v237 = vunpack.c.h.b16 %v75
    %v238 = vunpack.c.l.b16 %v76
    %v239 = vunpack.c.h.b16 %v76
    %v240 = vunpack.c.l.b16 %v77
    %v241 = vunpack.c.h.b16 %v77
    %v242 = vunpack.c.l.b16 %v78
    %v243 = vunpack.c.h.b16 %v78
    %v244 = vunpack.c.l.b16 %v79
    %v245 = vunpack.c.h.b16 %v79
    %v246 = vunpack.c.l.b16 %v80
    %v247 = vunpack.c.h.b16 %v80
    %v248 = vunpack.c.l.b16 %v81
    %v249 = vunpack.c.h.b16 %v81
    %v250 = vunpack.c.l.b16 %v82
    %v251 = vunpack.c.h.b16 %v82
    %v252 = vunpack.c.l.b16 %v83
    %v253 = vunpack.c.h.b16 %v83
    %v254 = vunpack.c.l.b16 %v84
    %v255 = vunpack.c.h.b16 %v84
    %v256 = vunpack.c.l.b16 %v85
    %v257 = vunpack.c.h.b16 %v85
    %v258 = vunpack.c.l.b16 %v86
    %v259 = vunpack.c.h.b16 %v86
    %v260 = vunpack.c.l.b16 %v87
    %v261 = vunpack.c.h.b16 %v87
    %v262 = vunpack.c.l.b16 %v88
    %v263 = vunpack.c.h.b16 %v88
    %v264 = vunpack.c.l.b16 %v89
    %v265 = vunpack.c.h.b16 %v89
    %v266 = vunpack.c.l.b16 %v90
    %v267 = vunpack.c.h.b16 %v90
    %v268 = vunpack.c.l.b16 %v91
    %v269 = vunpack.c.h.b16 %v91
    %v270 = vunpack.c.l.b16 %v92
    %v271 = vunpack.c.h.b16 %v92
    %v272 = vunpack.c.l.b16 %v93
    %v273 = vunpack.c.h.b16 %v93
    %v274 = vunpack.c.l.b16 %v94
    %v275 = vunpack.c.h.b16 %v94
    %v276 = vunpack.c.l.b16 %v95
    %v277 = vunpack.c.h.b16 %v95
    %v278 = vunpack.c.l.b16 %v96
    %v279 = vunpack.c.h.b16 %v96
    %v280 = vunpack.c.l.b16 %v97
    %v281 = vunpack.c.h.b16 %v97
    %v282 = vunpack.c.l.b16 %v98
    %v283 = vunpack.c.h.b16 %v98
    %v284 = vunpack.c.l.b16 %v99
    %v285 = vunpack.c.h.b16 %v99
    %v286 = vunpack.c.l.b16 %v100
    %v287 = vunpack.c.h.b16 %v100
    %v288 = vunpack.c.l.b16 %v101
    %v289 = vunpack.c.h.b16 %v101
    %v290 = vunpack.c.l.b16 %v102
    %v291 = vunpack.c.h.b16 %v102
    %v292 = vunpack.c.l.b16 %v103
    %v293 = vunpack.c.h.b16 %v103
    %v294 = vunpack.c.l.b16 %v104
    %v295 = vunpack.c.h.b16 %v104
    %v296 = vunpack.c.l.b16 %v105
    %v297 = vunpack.c.h.b16 %v105
    %v298 = vunpack.c.l.b16 %v106
    %v299 = vunpack.c.h.b16 %v106
    %v300 = vunpack.c.l.b16 %v107
    %v301 = vunpack.c.h.b16 %v107
    %v302 = vunpack.c.l.b16 %v108
    %v303 = vunpack.c.h.b16 %v108
    %v304 = vunpack.c.l.b16 %v109
    %v305 = vunpack.c.h.b16 %v109
    %v306 = vunpack.c.l.b16 %v110
    %v307 = vunpack.c.h.b16 %v110
    %v308 = vunpack.c.l.b16 %v111
    %v309 = vunpack.c.h.b16 %v111
    %v310 = vunpack.c.l.b16 %v112
    %v311 = vunpack.c.h.b16 %v112
    %v312 = vunpack.c.l.b16 %v113
    %v313 = vunpack.c.h.b16 %v113
    %v314 = vunpack.c.l.b16 %v114
    %v315 = vunpack.c.h.b16 %v114
    %v316 = vunpack.c.l.b16 %v115
    %v317 = vunpack.c.h.b16 %v115
    %v318 = vunpack.c.l.b16 %v116
    %v319 = vunpack.c.h.b16 %v116
    %v320 = vunpack.c.l.b16 %v117
    %v321 = vunpack.c.h.b16 %v117
    %v322 = vunpack.c.l.b16 %v118
    %v323 = vunpack.c.h.b16 %v118
    %v324 = vunpack.c.l.b16 %v119
    %v325 = vunpack.c.h.b16 %v119
    %v326 = vunpack.c.l.b16 %v120
    %v327 = vunpack.c.h.b16 %v120
    %v328 = vunpack.c.l.b16 %v121
    %v329 = vunpack.c.h.b16 %v121
    %v330 = vunpack.c.l.b16 %v122
    %v331 = vunpack.c.h.b16 %v122
    %v332 = vunpack.c.l.b16 %v123
    %v333 = vunpack.c.h.b16 %v123
    %v334 = vunpack.c.l.b16 %v124
    %v335 = vunpack.c.h.b16 %v124
    %v336 = vunpack.c.l.b16 %v125
    %v337 = vunpack.c.h.b16 %v125
    %v338 = vunpack.c.l.b16 %v126
    %v339 = vunpack.c.h.b16 %v126
    %v340 = vunpack.c.l.b16 %v127
    %v341 = vunpack.c.h.b16 %v127
    %v342 = vunpack.c.l.b16 %v128
    %v343 = vunpack.c.h.b16 %v128
    %v344 = vunpack.c.l.b16 %v129
    %v345 = vunpack.c.h.b16 %v129
    %v346 = vunpack.c.l.b16 %v130
    %v347 = vunpack.c.h.b16 %v130
    %v348 = vunpack.c.l.b16 %v131
    %v349 = vunpack.c.h.b16 %v131
    %v350 = vunpack.c.l.b16 %v132
    %v351 = vunpack.c.h.b16 %v132
    %v352 = vunpack.c.l.b16 %v133
    %v353 = vunpack.c.h.b16 %v133
    %v354 = vunpack.c.l.b16 %v134
    %v355 = vunpack.c.h.b16 %v134
    %v356 = vunpack.c.l.b16 %v135
    %v357 = vunpack.c.h.b16 %v135
    %v358 = vunpack.c.l.b16 %v136
    %v359 = vunpack.c.h.b16 %v136
    %v360 = vunpack.c.l.b16 %v137
    %v361 = vunpack.c.h.b16 %v137
    %v362 = vpack.c.b16 %v238, %v234
    %v363 = vpack.c.b16 %v239, %v235
    %v364 = vpack.c.b16 %v240, %v236
    %v365 = vpack.c.b16 %v241, %v237
    %v366 = vpack.c.b16 %v246, %v242
    %v367 = vpack.c.b16 %v247, %v243
    %v368 = vpack.c.b16 %v248, %v244
    %v369 = vpack.c.b16 %v249, %v245
    %v370 = vpack.c.b16 %v254, %v250
    %v371 = vpack.c.b16 %v255, %v251
    %v372 = vpack.c.b16 %v256, %v252
    %v373 = vpack.c.b16 %v257, %v253
    %v374 = vpack.c.b16 %v262, %v258
    %v375 = vpack.c.b16 %v263, %v259
    %v376 = vpack.c.b16 %v264, %v260
    %v377 = vpack.c.b16 %v265, %v261
    %v378 = vpack.c.b16 %v270, %v266
    %v379 = vpack.c.b16 %v271, %v267
    %v380 = vpack.c.b16 %v272, %v268
    %v381 = vpack.c.b16 %v273, %v269
    %v382 = vpack.c.b16 %v278, %v274
    %v383 = vpack.c.b16 %v279, %v275
    %v384 = vpack.c.b16 %v280, %v276
    %v385 = vpack.c.b16 %v281, %v277
    %v386 = vpack.c.b16 %v286, %v282
    %v387 = vpack.c.b16 %v287, %v283
    %v388 = vpack.c.b16 %v288, %v284
    %v389 = vpack.c.b16 %v289, %v285
    %v390 = vpack.c.b16 %v294, %v290
    %v391 = vpack.c.b16 %v295, %v291
    %v392 = vpack.c.b16 %v296, %v292
    %v393 = vpack.c.b16 %v297, %v293
    %v394 = vpack.c.b16 %v302, %v298
    %v395 = vpack.c.b16 %v303, %v299
    %v396 = vpack.c.b16 %v304, %v300
    %v397 = vpack.c.b16 %v305, %v301
    %v398 = vpack.c.b16 %v310, %v306
    %v399 = vpack.c.b16 %v311, %v307
    %v400 = vpack.c.b16 %v312, %v308
    %v401 = vpack.c.b16 %v313, %v309
    %v402 = vpack.c.b16 %v318, %v314
    %v403 = vpack.c.b16 %v319, %v315
    %v404 = vpack.c.b16 %v320, %v316
    %v405 = vpack.c.b16 %v321, %v317
    %v406 = vpack.c.b16 %v326, %v322
    %v407 = vpack.c.b16 %v327, %v323
    %v408 = vpack.c.b16 %v328, %v324
    %v409 = vpack.c.b16 %v329, %v325
    %v410 = vpack.c.b16 %v334, %v330
    %v411 = vpack.c.b16 %v335, %v331
    %v412 = vpack.c.b16 %v336, %v332
    %v413 = vpack.c.b16 %v337, %v333
    %v414 = vpack.c.b16 %v342, %v338
    %v415 = vpack.c.b16 %v343, %v339
    %v416 = vpack.c.b16 %v344, %v340
    %v417 = vpack.c.b16 %v345, %v341
    %v418 = vpack.c.b16 %v350, %v346
    %v419 = vpack.c.b16 %v351, %v347
    %v420 = vpack.c.b16 %v352, %v348
    %v421 = vpack.c.b16 %v353, %v349
    %v422 = vpack.c.b16 %v358, %v354
    %v423 = vpack.c.b16 %v359, %v355
    %v424 = vpack.c.b16 %v360, %v356
    %v425 = vpack.c.b16 %v361, %v357
    %490 = vmatprep.subr.bf16.mxu0 %v363
    %491 = vmatpush1.bf16.msra.mxu0 %v362
    %492 = vmatprep.subr.bf16.mxu0 %v367
    %493 = vmatpush1.bf16.msra.mxu0 %v366
    %494 = vmatprep.subr.bf16.mxu0 %v371
    %495 = vmatpush1.bf16.msra.mxu0 %v370
    %496 = vmatprep.subr.bf16.mxu0 %v375
    %497 = vmatpush1.bf16.msra.mxu0 %v374
    %498 = vmatprep.subr.bf16.mxu0 %v379
    %499 = vmatpush1.bf16.msra.mxu0 %v378
    %500 = vmatprep.subr.bf16.mxu0 %v383
    %501 = vmatpush1.bf16.msra.mxu0 %v382
    %502 = vmatprep.subr.bf16.mxu0 %v387
    %503 = vmatpush1.bf16.msra.mxu0 %v386
    %504 = vmatprep.subr.bf16.mxu0 %v391
    %505 = vmatpush1.bf16.msra.mxu0 %v390
    %506 = vmatprep.subr.bf16.mxu0 %v395
    %507 = vmatpush1.bf16.msra.mxu0 %v394
    %508 = vmatprep.subr.bf16.mxu0 %v399
    %509 = vmatpush1.bf16.msra.mxu0 %v398
    %510 = vmatprep.subr.bf16.mxu0 %v403
    %511 = vmatpush1.bf16.msra.mxu0 %v402
    %512 = vmatprep.subr.bf16.mxu0 %v407
    %513 = vmatpush1.bf16.msra.mxu0 %v406
    %514 = vmatprep.subr.bf16.mxu0 %v411
    %515 = vmatpush1.bf16.msra.mxu0 %v410
    %516 = vmatprep.subr.bf16.mxu0 %v415
    %517 = vmatpush1.bf16.msra.mxu0 %v414
    %518 = vmatprep.subr.bf16.mxu0 %v419
    %519 = vmatpush1.bf16.msra.mxu0 %v418
    %520 = vmatprep.subr.bf16.mxu0 %v423
    %521 = vmatpush1.bf16.msra.mxu0 %v422
    %522 = vmatprep.mubr.bf16.mxu0 %v167
    %523 = vmatmul.mubr.bf16.gmra.mrb[0].mxu0 %v166
    %v524 = vpop.f32.mrb[0].mxu0
    %v525 = vadd.f32 %v143, %v524
    %v526 = vpop.f32.mrb[0].mxu0
    %v527 = vadd.f32 %v147, %v526
    %v528 = vpop.f32.mrb[0].mxu0
    %v529 = vadd.f32 %v143, %v528
    %v530 = vpop.f32.mrb[0].mxu0
    %v531 = vadd.f32 %v147, %v530
    %532 = vdwg.mxu0
    %533 = vmatprep.subr.bf16.mxu0 %v365
    %534 = vmatpush1.bf16.msra.mxu0 %v364
    %535 = vmatprep.subr.bf16.mxu0 %v369
    %536 = vmatpush1.bf16.msra.mxu0 %v368
    %537 = vmatprep.subr.bf16.mxu0 %v373
    %538 = vmatpush1.bf16.msra.mxu0 %v372
    %539 = vmatprep.subr.bf16.mxu0 %v377
    %540 = vmatpush1.bf16.msra.mxu0 %v376
    %541 = vmatprep.subr.bf16.mxu0 %v381
    %542 = vmatpush1.bf16.msra.mxu0 %v380
    %543 = vmatprep.subr.bf16.mxu0 %v385
    %544 = vmatpush1.bf16.msra.mxu0 %v384
    %545 = vmatprep.subr.bf16.mxu0 %v389
    %546 = vmatpush1.bf16.msra.mxu0 %v388
    %547 = vmatprep.subr.bf16.mxu0 %v393
    %548 = vmatpush1.bf16.msra.mxu0 %v392
    %549 = vmatprep.subr.bf16.mxu0 %v397
    %550 = vmatpush1.bf16.msra.mxu0 %v396
    %551 = vmatprep.subr.bf16.mxu0 %v401
    %552 = vmatpush1.bf16.msra.mxu0 %v400
    %553 = vmatprep.subr.bf16.mxu0 %v405
    %554 = vmatpush1.bf16.msra.mxu0 %v404
    %555 = vmatprep.subr.bf16.mxu0 %v409
    %556 = vmatpush1.bf16.msra.mxu0 %v408
    %557 = vmatprep.subr.bf16.mxu0 %v413
    %558 = vmatpush1.bf16.msra.mxu0 %v412
    %559 = vmatprep.subr.bf16.mxu0 %v417
    %560 = vmatpush1.bf16.msra.mxu0 %v416
    %561 = vmatprep.subr.bf16.mxu0 %v421
    %562 = vmatpush1.bf16.msra.mxu0 %v420
    %563 = vmatprep.subr.bf16.mxu0 %v425
    %564 = vmatpush1.bf16.msra.mxu0 %v424
    %565 = vmatprep.mubr.bf16.mxu0 %v167
    %566 = vmatmul.mubr.bf16.gmra.mrb[0].mxu0 %v166
    %v567 = vpop.f32.mrb[0].mxu0
    %v568 = vadd.f32 %v151, %v567
    %v569 = vpop.f32.mrb[0].mxu0
    %v570 = vadd.f32 %v155, %v569
    %v571 = vpop.f32.mrb[0].mxu0
    %v572 = vadd.f32 %v151, %v571
    %v573 = vpop.f32.mrb[0].mxu0
    %v574 = vadd.f32 %v155, %v573
    %575 = vdwg.mxu0
    %v576 = vpack.c.bf16 %v529, %v525
    %v577 = vpack.c.bf16 %v531, %v527
    %v578 = vpack.c.bf16 %v572, %v568
    %v579 = vpack.c.bf16 %v574, %v570
    %v580 = vld [vmem:[#allocation8] sm:$0xf]
    %v581 = vld [vmem:[#allocation8 + $0x4] sm:$0xf]
    %v582 = vld [vmem:[#allocation8 + $0x8] sm:$0xf]
    %v583 = vld [vmem:[#allocation8 + $0xc] sm:$0xf]
    %v584 = vld [vmem:[#allocation8 + $0x10] sm:$0xf]
    %v585 = vld [vmem:[#allocation8 + $0x14] sm:$0xf]
    %v586 = vld [vmem:[#allocation8 + $0x18] sm:$0xf]
    %v587 = vld [vmem:[#allocation8 + $0x1c] sm:$0xf]
    %v588 = vld [vmem:[#allocation8 + $0x20] sm:$0xf]
    %v589 = vld [vmem:[#allocation8 + $0x24] sm:$0xf]
    %v590 = vld [vmem:[#allocation8 + $0x28] sm:$0xf]
    %v591 = vld [vmem:[#allocation8 + $0x2c] sm:$0xf]
    %v592 = vld [vmem:[#allocation8 + $0x30] sm:$0xf]
    %v593 = vld [vmem:[#allocation8 + $0x34] sm:$0xf]
    %v594 = vld [vmem:[#allocation8 + $0x38] sm:$0xf]
    %v595 = vld [vmem:[#allocation8 + $0x3c] sm:$0xf]
    %v596 = vld [vmem:[#allocation8 + $0x40] sm:$0xf]
    %v597 = vld [vmem:[#allocation8 + $0x44] sm:$0xf]
    %v598 = vld [vmem:[#allocation8 + $0x48] sm:$0xf]
    %v599 = vld [vmem:[#allocation8 + $0x4c] sm:$0xf]
    %v600 = vld [vmem:[#allocation8 + $0x50] sm:$0xf]
    %v601 = vld [vmem:[#allocation8 + $0x54] sm:$0xf]
    %v602 = vld [vmem:[#allocation8 + $0x58] sm:$0xf]
    %v603 = vld [vmem:[#allocation8 + $0x5c] sm:$0xf]
    %v604 = vld [vmem:[#allocation8 + $0x60] sm:$0xf]
    %v605 = vld [vmem:[#allocation8 + $0x64] sm:$0xf]
    %v606 = vld [vmem:[#allocation8 + $0x68] sm:$0xf]
    %v607 = vld [vmem:[#allocation8 + $0x6c] sm:$0xf]
    %v608 = vld [vmem:[#allocation8 + $0x70] sm:$0xf]
    %v609 = vld [vmem:[#allocation8 + $0x74] sm:$0xf]
    %v610 = vld [vmem:[#allocation8 + $0x78] sm:$0xf]
    %v611 = vld [vmem:[#allocation8 + $0x7c] sm:$0xf]
    %v612 = vld [vmem:[#allocation8 + $0x80] sm:$0xf]
    %v613 = vld [vmem:[#allocation8 + $0x84] sm:$0xf]
    %v614 = vld [vmem:[#allocation8 + $0x88] sm:$0xf]
    %v615 = vld [vmem:[#allocation8 + $0x8c] sm:$0xf]
    %v616 = vld [vmem:[#allocation8 + $0x90] sm:$0xf]
    %v617 = vld [vmem:[#allocation8 + $0x94] sm:$0xf]
    %v618 = vld [vmem:[#allocation8 + $0x98] sm:$0xf]
    %v619 = vld [vmem:[#allocation8 + $0x9c] sm:$0xf]
    %v620 = vld [vmem:[#allocation8 + $0xa0] sm:$0xf]
    %v621 = vld [vmem:[#allocation8 + $0xa4] sm:$0xf]
    %v622 = vld [vmem:[#allocation8 + $0xa8] sm:$0xf]
    %v623 = vld [vmem:[#allocation8 + $0xac] sm:$0xf]
    %v624 = vld [vmem:[#allocation8 + $0xb0] sm:$0xf]
    %v625 = vld [vmem:[#allocation8 + $0xb4] sm:$0xf]
    %v626 = vld [vmem:[#allocation8 + $0xb8] sm:$0xf]
    %v627 = vld [vmem:[#allocation8 + $0xbc] sm:$0xf]
    %v628 = vld [vmem:[#allocation8 + $0xc0] sm:$0xf]
    %v629 = vld [vmem:[#allocation8 + $0xc4] sm:$0xf]
    %v630 = vld [vmem:[#allocation8 + $0xc8] sm:$0xf]
    %v631 = vld [vmem:[#allocation8 + $0xcc] sm:$0xf]
    %v632 = vld [vmem:[#allocation8 + $0xd0] sm:$0xf]
    %v633 = vld [vmem:[#allocation8 + $0xd4] sm:$0xf]
    %v634 = vld [vmem:[#allocation8 + $0xd8] sm:$0xf]
    %v635 = vld [vmem:[#allocation8 + $0xdc] sm:$0xf]
    %v636 = vld [vmem:[#allocation8 + $0xe0] sm:$0xf]
    %v637 = vld [vmem:[#allocation8 + $0xe4] sm:$0xf]
    %v638 = vld [vmem:[#allocation8 + $0xe8] sm:$0xf]
    %v639 = vld [vmem:[#allocation8 + $0xec] sm:$0xf]
    %v640 = vld [vmem:[#allocation8 + $0xf0] sm:$0xf]
    %v641 = vld [vmem:[#allocation8 + $0xf4] sm:$0xf]
    %v642 = vld [vmem:[#allocation8 + $0xf8] sm:$0xf]
    %v643 = vld [vmem:[#allocation8 + $0xfc] sm:$0xf]
    %v708 = vunpack.c.l.b16 %v580
    %v709 = vunpack.c.l.b16 %v581
    %v710 = vunpack.c.l.b16 %v582
    %v711 = vunpack.c.l.b16 %v583
    %v712 = vunpack.c.l.b16 %v584
    %v713 = vunpack.c.l.b16 %v585
    %v714 = vunpack.c.l.b16 %v586
    %v715 = vunpack.c.l.b16 %v587
    %v716 = vunpack.c.l.b16 %v588
    %v717 = vunpack.c.l.b16 %v589
    %v718 = vunpack.c.l.b16 %v590
    %v719 = vunpack.c.l.b16 %v591
    %v720 = vunpack.c.l.b16 %v592
    %v721 = vunpack.c.l.b16 %v593
    %v722 = vunpack.c.l.b16 %v594
    %v723 = vunpack.c.l.b16 %v595
    %v724 = vunpack.c.l.b16 %v596
    %v725 = vunpack.c.l.b16 %v597
    %v726 = vunpack.c.l.b16 %v598
    %v727 = vunpack.c.l.b16 %v599
    %v728 = vunpack.c.l.b16 %v600
    %v729 = vunpack.c.l.b16 %v601
    %v730 = vunpack.c.l.b16 %v602
    %v731 = vunpack.c.l.b16 %v603
    %v732 = vunpack.c.l.b16 %v604
    %v733 = vunpack.c.l.b16 %v605
    %v734 = vunpack.c.l.b16 %v606
    %v735 = vunpack.c.l.b16 %v607
    %v736 = vunpack.c.l.b16 %v608
    %v737 = vunpack.c.l.b16 %v609
    %v738 = vunpack.c.l.b16 %v610
    %v739 = vunpack.c.l.b16 %v611
    %v740 = vunpack.c.l.b16 %v612
    %v741 = vunpack.c.l.b16 %v613
    %v742 = vunpack.c.l.b16 %v614
    %v743 = vunpack.c.l.b16 %v615
    %v744 = vunpack.c.l.b16 %v616
    %v745 = vunpack.c.l.b16 %v617
    %v746 = vunpack.c.l.b16 %v618
    %v747 = vunpack.c.l.b16 %v619
    %v748 = vunpack.c.l.b16 %v620
    %v749 = vunpack.c.l.b16 %v621
    %v750 = vunpack.c.l.b16 %v622
    %v751 = vunpack.c.l.b16 %v623
    %v752 = vunpack.c.l.b16 %v624
    %v753 = vunpack.c.l.b16 %v625
    %v754 = vunpack.c.l.b16 %v626
    %v755 = vunpack.c.l.b16 %v627
    %v756 = vunpack.c.l.b16 %v628
    %v757 = vunpack.c.l.b16 %v629
    %v758 = vunpack.c.l.b16 %v630
    %v759 = vunpack.c.l.b16 %v631
    %v760 = vunpack.c.l.b16 %v632
    %v761 = vunpack.c.l.b16 %v633
    %v762 = vunpack.c.l.b16 %v634
    %v763 = vunpack.c.l.b16 %v635
    %v764 = vunpack.c.l.b16 %v636
    %v765 = vunpack.c.l.b16 %v637
    %v766 = vunpack.c.l.b16 %v638
    %v767 = vunpack.c.l.b16 %v639
    %v768 = vunpack.c.l.b16 %v640
    %v769 = vunpack.c.l.b16 %v641
    %v770 = vunpack.c.l.b16 %v642
    %v771 = vunpack.c.l.b16 %v643
    %v772 = vpack.c.b16 %v709, %v708
    %v773 = vpack.c.b16 %v711, %v710
    %v774 = vpack.c.b16 %v713, %v712
    %v775 = vpack.c.b16 %v715, %v714
    %v776 = vpack.c.b16 %v717, %v716
    %v777 = vpack.c.b16 %v719, %v718
    %v778 = vpack.c.b16 %v721, %v720
    %v779 = vpack.c.b16 %v723, %v722
    %v780 = vpack.c.b16 %v725, %v724
    %v781 = vpack.c.b16 %v727, %v726
    %v782 = vpack.c.b16 %v729, %v728
    %v783 = vpack.c.b16 %v731, %v730
    %v784 = vpack.c.b16 %v733, %v732
    %v785 = vpack.c.b16 %v735, %v734
    %v786 = vpack.c.b16 %v737, %v736
    %v787 = vpack.c.b16 %v739, %v738
    %v788 = vpack.c.b16 %v741, %v740
    %v789 = vpack.c.b16 %v743, %v742
    %v790 = vpack.c.b16 %v745, %v744
    %v791 = vpack.c.b16 %v747, %v746
    %v792 = vpack.c.b16 %v749, %v748
    %v793 = vpack.c.b16 %v751, %v750
    %v794 = vpack.c.b16 %v753, %v752
    %v795 = vpack.c.b16 %v755, %v754
    %v796 = vpack.c.b16 %v757, %v756
    %v797 = vpack.c.b16 %v759, %v758
    %v798 = vpack.c.b16 %v761, %v760
    %v799 = vpack.c.b16 %v763, %v762
    %v800 = vpack.c.b16 %v765, %v764
    %v801 = vpack.c.b16 %v767, %v766
    %v802 = vpack.c.b16 %v769, %v768
    %v803 = vpack.c.b16 %v771, %v770
    %836 = vmatprep.subr.bf16.mxu0 0
    %837 = vmatpush1.bf16.msra.mxu0 %v772
    %838 = vmatprep.subr.bf16.mxu0 0
    %839 = vmatpush1.bf16.msra.mxu0 %v773
    %840 = vmatprep.subr.bf16.mxu0 0
    %841 = vmatpush1.bf16.msra.mxu0 %v774
    %842 = vmatprep.subr.bf16.mxu0 0
    %843 = vmatpush1.bf16.msra.mxu0 %v775
    %844 = vmatprep.subr.bf16.mxu0 0
    %845 = vmatpush1.bf16.msra.mxu0 %v776
    %846 = vmatprep.subr.bf16.mxu0 0
    %847 = vmatpush1.bf16.msra.mxu0 %v777
    %848 = vmatprep.subr.bf16.mxu0 0
    %849 = vmatpush1.bf16.msra.mxu0 %v778
    %850 = vmatprep.subr.bf16.mxu0 0
    %851 = vmatpush1.bf16.msra.mxu0 %v779
    %852 = vmatprep.subr.bf16.mxu0 0
    %853 = vmatpush1.bf16.msra.mxu0 %v780
    %854 = vmatprep.subr.bf16.mxu0 0
    %855 = vmatpush1.bf16.msra.mxu0 %v781
    %856 = vmatprep.subr.bf16.mxu0 0
    %857 = vmatpush1.bf16.msra.mxu0 %v782
    %858 = vmatprep.subr.bf16.mxu0 0
    %859 = vmatpush1.bf16.msra.mxu0 %v783
    %860 = vmatprep.subr.bf16.mxu0 0
    %861 = vmatpush1.bf16.msra.mxu0 %v784
    %862 = vmatprep.subr.bf16.mxu0 0
    %863 = vmatpush1.bf16.msra.mxu0 %v785
    %864 = vmatprep.subr.bf16.mxu0 0
    %865 = vmatpush1.bf16.msra.mxu0 %v786
    %866 = vmatprep.subr.bf16.mxu0 0
    %867 = vmatpush1.bf16.msra.mxu0 %v787
    %868 = vmatprep.mubr.bf16.mxu0 %v577
    %869 = vmatmul.mubr.bf16.gmra.mrb[0].mxu0 %v576
    %v870 = vpop.f32.mrb[0].mxu0
    %v871 = vadd.f32 0.0, %v870
    %v872 = vpop.f32.mrb[0].mxu0
    %v873 = vpop.f32.mrb[0].mxu0
    %v874 = vadd.f32 0.0, %v873
    %v875 = vpop.f32.mrb[0].mxu0
    %876 = vdwg.mxu0
    %877 = vmatprep.subr.bf16.mxu0 0
    %878 = vmatpush1.bf16.msra.mxu0 %v788
    %879 = vmatprep.subr.bf16.mxu0 0
    %880 = vmatpush1.bf16.msra.mxu0 %v789
    %881 = vmatprep.subr.bf16.mxu0 0
    %882 = vmatpush1.bf16.msra.mxu0 %v790
    %883 = vmatprep.subr.bf16.mxu0 0
    %884 = vmatpush1.bf16.msra.mxu0 %v791
    %885 = vmatprep.subr.bf16.mxu0 0
    %886 = vmatpush1.bf16.msra.mxu0 %v792
    %887 = vmatprep.subr.bf16.mxu0 0
    %888 = vmatpush1.bf16.msra.mxu0 %v793
    %889 = vmatprep.subr.bf16.mxu0 0
    %890 = vmatpush1.bf16.msra.mxu0 %v794
    %891 = vmatprep.subr.bf16.mxu0 0
    %892 = vmatpush1.bf16.msra.mxu0 %v795
    %893 = vmatprep.subr.bf16.mxu0 0
    %894 = vmatpush1.bf16.msra.mxu0 %v796
    %895 = vmatprep.subr.bf16.mxu0 0
    %896 = vmatpush1.bf16.msra.mxu0 %v797
    %897 = vmatprep.subr.bf16.mxu0 0
    %898 = vmatpush1.bf16.msra.mxu0 %v798
    %899 = vmatprep.subr.bf16.mxu0 0
    %900 = vmatpush1.bf16.msra.mxu0 %v799
    %901 = vmatprep.subr.bf16.mxu0 0
    %902 = vmatpush1.bf16.msra.mxu0 %v800
    %903 = vmatprep.subr.bf16.mxu0 0
    %904 = vmatpush1.bf16.msra.mxu0 %v801
    %905 = vmatprep.subr.bf16.mxu0 0
    %906 = vmatpush1.bf16.msra.mxu0 %v802
    %907 = vmatprep.subr.bf16.mxu0 0
    %908 = vmatpush1.bf16.msra.mxu0 %v803
    %909 = vmatprep.mubr.bf16.mxu0 %v579
    %910 = vmatmul.mubr.bf16.gmra.mrb[0].mxu0 %v578
    %v911 = vpop.f32.mrb[0].mxu0
    %v912 = vadd.f32 %v871, %v911
    %v913 = vpop.f32.mrb[0].mxu0
    %v914 = vpop.f32.mrb[0].mxu0
    %v915 = vadd.f32 %v874, %v914
    %v916 = vpop.f32.mrb[0].mxu0
    %917 = vdwg.mxu0
    %918 = vst [vmem:[#allocation10] sm:$0xff] %v912
    %919 = vst [vmem:[#allocation10 + $0x8] sm:$0xff] %v915
    // Predicated region
    $region34: #{tpu_custom_call.1} parent=1 // pred_check
      _
    $region35: #{tpu_custom_call.1} parent=1 // pred_check_branch
      %921 = sbr.rel (0) target = $region37
    $region36: #{tpu_custom_call.1} parent=1 // pred_region
      %s923 = ssub.s32 256, 256
      %924 = vsyncadd [#allocation4], %s923
      %s925 = sshll.u32 [#allocation10], 4
      %s926 = int_to_ptr.vmem [resolvable:$true] %s925
      %931 = dma.vmem_to_hbm [thread:$0]  %s926, 256, %s4, [#allocation4], 128, 128, 8
    $region37: #{tpu_custom_call.1} parent=1 // pred_fallthru
      _
    // Predicated region
    $region38: #{tpu_custom_call.1} parent=1 // pred_check
      _
    $region39: #{tpu_custom_call.1} parent=1 // pred_check_branch
      %933 = sbr.rel (0) target = $region41
    $region40: #{tpu_custom_call.1} parent=1 // pred_region
      %934 = dma.done [#allocation4], 256
    $region41: #{tpu_custom_call.1} parent=1 // pred_fallthru
      _
    %935 = vsyncpa [#allocation3], 1
    %936 = vsyncpa [#allocation6], 1
    %937 = vsyncpa [#allocation9], 1
    %938 = vsyncpa [#allocation4], 1

</llo_original>
